<compile_context>
chip_gen: v7x
topology: tpu7x:2x2x1
jax: 0.10.0
libtpu: 0.0.40
codegen_flags: <defaults>
</compile_context>

<pallas_src>
import jax
import jax.numpy as jnp
from jax.experimental import pallas as pl
from jax.experimental.pallas import tpu as pltpu

IN_FEATURES = 10
OUT_FEATURES = 1
GROUP = 128  # batch rows folded into the lane axis per reshaped row


def _round_up(v, m):
    return ((v + m - 1) // m) * m


def linear_kernel(x_ref, w_ref, b_ref, o_ref):
    # x_ref: (TBG, GROUP*IN)  -- 128 batch rows per sublane-row, lane-dense
    # w_ref: (GROUP*IN, GROUP)-- kron(eye(128), w): W[g*10+k, g] = w[k], resident
    # b_ref: (1,) SMEM        -- scalar bias
    # o_ref: (TBG, GROUP)     -- lane-dense outputs (unmasked stores)
    acc = jnp.dot(x_ref[...], w_ref[...], preferred_element_type=jnp.float32)
    o_ref[...] = (acc + b_ref[0]).astype(o_ref.dtype)


def linear_pallas(x, w_t, b, *, tb_rows=65536):
    """y = x @ w_t + b, equivalent to torch nn.Linear(10, 1).

    x:   (B, IN_FEATURES) f32
    w_t: (IN_FEATURES, OUT_FEATURES) f32  (transposed PyTorch weight)
    b:   (OUT_FEATURES,) f32
    """
    B = x.shape[0]
    # Pad batch only to a multiple of 128 (lane alignment); free when aligned.
    B_pad = _round_up(B, GROUP)
    if B_pad != B:
        x = jnp.pad(x, ((0, B_pad - B), (0, 0)))

    # Free row-major reshape (no copy): (B_pad, 10) -> (B_pad/128, 1280).
    nrows = B_pad // GROUP
    x2d = x.reshape(nrows, GROUP * IN_FEATURES)

    # Sublane tile (rows of x2d).  Keep >= 2 grid steps when possible so the
    # "parallel" axis can shard across both TensorCores on v7x.
    tbg_cap = max(8, tb_rows // GROUP)
    if nrows <= 8:
        tbg = nrows                               # single (possibly <8-row) block
    else:
        half = _round_up(pl.cdiv(nrows, 2), 8)    # target >= 2 grid steps
        tbg = max(8, min(tbg_cap, half))
    grid = (pl.cdiv(nrows, tbg),)

    # Fold the 10 weights into a block-diagonal (1280, 128) operator so the
    # whole per-block contraction is one MXU matmul.  Tiny (640 KiB), resident.
    w_big = jnp.kron(jnp.eye(GROUP, dtype=x.dtype), w_t.astype(x.dtype))

    cost = pl.CostEstimate(
        flops=20 * B_pad,            # semantic flops of the linear layer
        transcendentals=0,
        bytes_accessed=44 * B_pad + w_big.size * 4,
    )

    y2d = pl.pallas_call(
        linear_kernel,
        out_shape=jax.ShapeDtypeStruct((nrows, GROUP), x.dtype),
        grid=grid,
        in_specs=[
            pl.BlockSpec((tbg, GROUP * IN_FEATURES), lambda i: (i, 0)),   # x tiles
            pl.BlockSpec((GROUP * IN_FEATURES, GROUP), lambda i: (0, 0)), # weights, resident
            pl.BlockSpec(memory_space=pltpu.MemorySpace.SMEM),            # bias scalar
        ],
        out_specs=pl.BlockSpec((tbg, GROUP), lambda i: (i, 0)),
        compiler_params=pltpu.CompilerParams(
            dimension_semantics=("parallel",),
        ),
        cost_estimate=cost,
    )(x2d, w_big, b)

    # Back to nn.Linear layout (B, 1); drop batch padding. Reshapes are free.
    return y2d.reshape(B_pad)[:B].reshape(B, OUT_FEATURES)


def init_params(key):
    # Deterministic init mirroring nn.Linear's uniform(-1/sqrt(in), 1/sqrt(in)).
    kw, kb = jax.random.split(key)
    bound = 1.0 / jnp.sqrt(jnp.float32(IN_FEATURES))
    # PyTorch weight is (OUT, IN); we keep the transposed (IN, OUT) form.
    w_t = jax.random.uniform(
        kw, (IN_FEATURES, OUT_FEATURES), jnp.float32, -bound, bound
    )
    b = jax.random.uniform(kb, (OUT_FEATURES,), jnp.float32, -bound, bound)
    return w_t, b


if __name__ == "__main__":
    key = jax.random.PRNGKey(0)
    kx, kp = jax.random.split(key)
    w_t, b = init_params(kp)

    # Small shape consistent with the module's forward.
    batch = 8
    x = jax.random.normal(kx, (batch, IN_FEATURES), jnp.float32)
    y = linear_pallas(x, w_t, b)
    jax.block_until_ready(y)
    y_ref = x @ w_t + b
    assert y.shape == (batch, OUT_FEATURES)
    assert jnp.allclose(y, y_ref, atol=1e-5, rtol=1e-5)

    # Also exercise the non-128-aligned / ragged-tile path.
    batch2 = 1000
    x2 = jax.random.normal(jax.random.fold_in(kx, 1), (batch2, IN_FEATURES), jnp.float32)
    y2 = linear_pallas(x2, w_t, b)
    jax.block_until_ready(y2)
    y2_ref = x2 @ w_t + b
    assert y2.shape == (batch2, OUT_FEATURES)
    assert jnp.allclose(y2, y2_ref, atol=1e-5, rtol=1e-5)

    print("KERNEL_OK")
</pallas_src>

<mosaic_0001>
module attributes {stable_mosaic.version = 11 : i64} {
  func.func @linear_kernel(%arg0: i32, %arg1: memref<1x1280xf32, #tpu.memory_space<vmem>>, %arg2: memref<1280x128xf32, #tpu.memory_space<vmem>>, %arg3: memref<1xf32, #tpu.memory_space<smem>>, %arg4: memref<1x128xf32, #tpu.memory_space<vmem>>) attributes {dimension_semantics = [#tpu.dimension_semantics<parallel>], iteration_bounds = array<i64: 1>, scalar_prefetch = 0 : i64, scratch_operands = 0 : i64, tpu.core_type = #tpu.core_type<tc>, window_params = [{transform_indices = @transform_0, window_bounds = array<i64: 1, 1280>}, {pipeline_mode = #tpu.pipeline_mode<synchronous>, transform_indices = @transform_1, window_bounds = array<i64: 1280, 128>}, {transform_indices = @transform_2, window_bounds = array<i64: 1>}, {transform_indices = @transform_3, window_bounds = array<i64: 1, 128>}]} {
    %c0 = arith.constant 0 : index
    %c0_0 = arith.constant 0 : index
    %0 = vector.load %arg1[%c0, %c0_0] : memref<1x1280xf32, #tpu.memory_space<vmem>>, vector<1x1280xf32>
    %c0_1 = arith.constant 0 : index
    %c0_2 = arith.constant 0 : index
    %1 = vector.load %arg2[%c0_1, %c0_2] : memref<1280x128xf32, #tpu.memory_space<vmem>>, vector<1280x128xf32>
    %cst = arith.constant dense<0.000000e+00> : vector<1x128xf32>
    %2 = tpu.matmul %0, %1, %cst {dimension_numbers = #tpu.dot_dimension_numbers<[1], [0], [0], [1], [0, 0, 1, 1], [], []>} : vector<1x1280xf32>, vector<1280x128xf32>, vector<1x128xf32> -> vector<1x128xf32>
    %c0_3 = arith.constant 0 : index
    %3 = memref.load %arg3[%c0_3] : memref<1xf32, #tpu.memory_space<smem>>
    %4 = vector.broadcast %3 : f32 to vector<1x128xf32>
    %5 = arith.addf %2, %4 : vector<1x128xf32>
    %c0_4 = arith.constant 0 : index
    %c0_5 = arith.constant 0 : index
    %6 = vector.load %arg4[%c0_4, %c0_5] : memref<1x128xf32, #tpu.memory_space<vmem>>, vector<1x128xf32>
    tpu.vector_store %arg4[%c0_4, %c0_5], %5 {strides = array<i32>} : memref<1x128xf32, #tpu.memory_space<vmem>>, vector<1x128xf32>,
    return
  }
  func.func @transform_0(%arg0: i32) -> (i32, i32) {
    %c0_i32 = arith.constant 0 : i32
    %c0_i32_0 = arith.constant 0 : i32
    return %arg0, %c0_i32 : i32, i32
  }
  func.func @transform_1(%arg0: i32) -> (i32, i32) {
    %c0_i32 = arith.constant 0 : i32
    %c0_i32_0 = arith.constant 0 : i32
    %c0_i32_1 = arith.constant 0 : i32
    return %c0_i32, %c0_i32_0 : i32, i32
  }
  func.func @transform_2(%arg0: i32) -> i32 {
    %c0_i32 = arith.constant 0 : i32
    %c0_i32_0 = arith.constant 0 : i32
    return %c0_i32 : i32
  }
  func.func @transform_3(%arg0: i32) -> (i32, i32) {
    %c0_i32 = arith.constant 0 : i32
    %c0_i32_0 = arith.constant 0 : i32
    return %arg0, %c0_i32 : i32, i32
  }
}

</mosaic_0001>

<llo_original>
// kernel: tpu_custom_call.1
$region0: #{tpu_custom_call.1}
  #allocation0 [shape = 'u32[]', space=smem, size = 0x4, offset = 0x4, fixed_abs, tag = 'smem constant byte address 0x4 - core index']
  #allocation1 [shape = 'u32[144,128]{1,0:T(1,128)}', space=vmem, size = 0x12000, scoped, tag = 'internal scratch']
  #allocation2 [shape = 'f32[1]{0:T(128)S(6)}', space=smem, size = 0x200, scoped, tag = 'scoped memory for tpu_custom_call.1']
  %s0 = inlined_call_operand.hbm [shape: f32[1,1280], index: 0, kind: input, shape index: {}]
  %s1 = inlined_call_operand.hbm [shape: f32[1280,128], index: 1, kind: input, shape index: {}]
  %s2 = inlined_call_operand.<no memory space> [shape: f32[1], index: 2, kind: input, shape index: {}]
  %s3 = inlined_call_operand.hbm [shape: f32[1,128], index: 3, kind: output, shape index: {}]
  %s4 = sld [smem:[#allocation0]]
  $region30: #{tpu_custom_call.1} parent=0
    _
  %s6 = ssub.s32 1, %s4
  %s7 = scalar_select 0, %s6, %s4
  %8 = sst [smem:[#allocation2]] %s2
  $region1: #{tpu_custom_call.1} parent=0
    #allocation3 [shape = 'u8[5120]{0}', space=vmem, size = 0x1400, scoped, tag = 'input window, operand 0, single buffered']
    #allocation4 [shape = 's32[1]{0}', space=sflag, size = 0x4, scoped, tag = 'scoped memory for tpu_custom_call.1']
    #allocation5 [shape = 's32[1]{0}', space=sflag, size = 0x4, scoped, tag = 'scoped memory for tpu_custom_call.1']
    #allocation6 [shape = 'u8[655360]{0}', space=vmem, size = 0xa0000, scoped, tag = 'input window, operand 1, single buffered']
    #allocation7 [shape = 's32[1]{0}', space=sflag, size = 0x4, scoped, tag = 'scoped memory for tpu_custom_call.1']
    #allocation8 [shape = 'u8[512]{0}', space=vmem, size = 0x400, scoped, tag = 'output window, operand 0, single buffered']
    %9 = vsyncpa [#allocation4], 0
    %10 = vsyncpa [#allocation7], 0
    %11 = vsyncpa [#allocation5], 0
    // Predicated region
    $region2: #{tpu_custom_call.1} parent=1 // pred_check
      _
    $region3: #{tpu_custom_call.1} parent=1 // pred_check_branch
      %13 = sbr.rel (0) target = $region5
    $region4: #{tpu_custom_call.1} parent=1 // pred_region
      %s15 = ssub.s32 160, 160
      %16 = vsyncadd [#allocation4], %s15
      %s18 = sshll.u32 [#allocation3], 4
      %s19 = int_to_ptr.vmem [resolvable:$true] %s18
      %21 = dma.hbm_to_vmem [thread:$0]  %s0, 160, %s19, [#allocation4]
    $region5: #{tpu_custom_call.1} parent=1 // pred_fallthru
      _
    // Predicated region
    $region6: #{tpu_custom_call.1} parent=1 // pred_check
      _
    $region7: #{tpu_custom_call.1} parent=1 // pred_check_branch
      %23 = sbr.rel (0) target = $region9
    $region8: #{tpu_custom_call.1} parent=1 // pred_region
      %s25 = ssub.s32 20480, 20480
      %26 = vsyncadd [#allocation7], %s25
      %s27 = sshll.u32 [#allocation6], 4
      %s28 = int_to_ptr.vmem [resolvable:$true] %s27
      %33 = dma.hbm_to_vmem [thread:$0]  %s1, 20480, %s28, [#allocation7], 128, 128, 8
    $region9: #{tpu_custom_call.1} parent=1 // pred_fallthru
      _
    // Predicated region
    $region10: #{tpu_custom_call.1} parent=1 // pred_check
      _
    $region11: #{tpu_custom_call.1} parent=1 // pred_check_branch
      %35 = sbr.rel (0) target = $region13
    $region12: #{tpu_custom_call.1} parent=1 // pred_region
      _
    $region13: #{tpu_custom_call.1} parent=1 // pred_fallthru
      _
    // Predicated region
    $region14: #{tpu_custom_call.1} parent=1 // pred_check
      _
    $region15: #{tpu_custom_call.1} parent=1 // pred_check_branch
      %37 = sbr.rel (0) target = $region17
    $region16: #{tpu_custom_call.1} parent=1 // pred_region
      %38 = dma.done [#allocation4], 160
    $region17: #{tpu_custom_call.1} parent=1 // pred_fallthru
      _
    // Predicated region
    $region18: #{tpu_custom_call.1} parent=1 // pred_check
      _
    $region19: #{tpu_custom_call.1} parent=1 // pred_check_branch
      %40 = sbr.rel (0) target = $region21
    $region20: #{tpu_custom_call.1} parent=1 // pred_region
      %41 = dma.done [#allocation7], 20480
    $region21: #{tpu_custom_call.1} parent=1 // pred_fallthru
      _
    %v42 = vld [vmem:[#allocation3] sm:$0xff]
    %v43 = vld [vmem:[#allocation3 + $0x8] sm:$0x3]
    %v44 = vld [vmem:[#allocation6] sm:$0xff]
    %v45 = vld [vmem:[#allocation6 + $0x8] sm:$0xff]
    %v46 = vld [vmem:[#allocation6 + $0x10] sm:$0xff]
    %v47 = vld [vmem:[#allocation6 + $0x18] sm:$0xff]
    %v48 = vld [vmem:[#allocation6 + $0x20] sm:$0xff]
    %v49 = vld [vmem:[#allocation6 + $0x28] sm:$0xff]
    %v50 = vld [vmem:[#allocation6 + $0x30] sm:$0xff]
    %v51 = vld [vmem:[#allocation6 + $0x38] sm:$0xff]
    %v52 = vld [vmem:[#allocation6 + $0x40] sm:$0xff]
    %v53 = vld [vmem:[#allocation6 + $0x48] sm:$0xff]
    %v54 = vld [vmem:[#allocation6 + $0x50] sm:$0xff]
    %v55 = vld [vmem:[#allocation6 + $0x58] sm:$0xff]
    %v56 = vld [vmem:[#allocation6 + $0x60] sm:$0xff]
    %v57 = vld [vmem:[#allocation6 + $0x68] sm:$0xff]
    %v58 = vld [vmem:[#allocation6 + $0x70] sm:$0xff]
    %v59 = vld [vmem:[#allocation6 + $0x78] sm:$0xff]
    %v60 = vld [vmem:[#allocation6 + $0x80] sm:$0xff]
    %v61 = vld [vmem:[#allocation6 + $0x88] sm:$0xff]
    %v62 = vld [vmem:[#allocation6 + $0x90] sm:$0xff]
    %v63 = vld [vmem:[#allocation6 + $0x98] sm:$0xff]
    %v64 = vld [vmem:[#allocation6 + $0xa0] sm:$0xff]
    %v65 = vld [vmem:[#allocation6 + $0xa8] sm:$0xff]
    %v66 = vld [vmem:[#allocation6 + $0xb0] sm:$0xff]
    %v67 = vld [vmem:[#allocation6 + $0xb8] sm:$0xff]
    %v68 = vld [vmem:[#allocation6 + $0xc0] sm:$0xff]
    %v69 = vld [vmem:[#allocation6 + $0xc8] sm:$0xff]
    %v70 = vld [vmem:[#allocation6 + $0xd0] sm:$0xff]
    %v71 = vld [vmem:[#allocation6 + $0xd8] sm:$0xff]
    %v72 = vld [vmem:[#allocation6 + $0xe0] sm:$0xff]
    %v73 = vld [vmem:[#allocation6 + $0xe8] sm:$0xff]
    %v74 = vld [vmem:[#allocation6 + $0xf0] sm:$0xff]
    %v75 = vld [vmem:[#allocation6 + $0xf8] sm:$0xff]
    %v76 = vld [vmem:[#allocation6 + $0x100] sm:$0xff]
    %v77 = vld [vmem:[#allocation6 + $0x108] sm:$0xff]
    %v78 = vld [vmem:[#allocation6 + $0x110] sm:$0xff]
    %v79 = vld [vmem:[#allocation6 + $0x118] sm:$0xff]
    %v80 = vld [vmem:[#allocation6 + $0x120] sm:$0xff]
    %v81 = vld [vmem:[#allocation6 + $0x128] sm:$0xff]
    %v82 = vld [vmem:[#allocation6 + $0x130] sm:$0xff]
    %v83 = vld [vmem:[#allocation6 + $0x138] sm:$0xff]
    %v84 = vld [vmem:[#allocation6 + $0x140] sm:$0xff]
    %v85 = vld [vmem:[#allocation6 + $0x148] sm:$0xff]
    %v86 = vld [vmem:[#allocation6 + $0x150] sm:$0xff]
    %v87 = vld [vmem:[#allocation6 + $0x158] sm:$0xff]
    %v88 = vld [vmem:[#allocation6 + $0x160] sm:$0xff]
    %v89 = vld [vmem:[#allocation6 + $0x168] sm:$0xff]
    %v90 = vld [vmem:[#allocation6 + $0x170] sm:$0xff]
    %v91 = vld [vmem:[#allocation6 + $0x178] sm:$0xff]
    %v92 = vld [vmem:[#allocation6 + $0x180] sm:$0xff]
    %v93 = vld [vmem:[#allocation6 + $0x188] sm:$0xff]
    %v94 = vld [vmem:[#allocation6 + $0x190] sm:$0xff]
    %v95 = vld [vmem:[#allocation6 + $0x198] sm:$0xff]
    %v96 = vld [vmem:[#allocation6 + $0x1a0] sm:$0xff]
    %v97 = vld [vmem:[#allocation6 + $0x1a8] sm:$0xff]
    %v98 = vld [vmem:[#allocation6 + $0x1b0] sm:$0xff]
    %v99 = vld [vmem:[#allocation6 + $0x1b8] sm:$0xff]
    %v100 = vld [vmem:[#allocation6 + $0x1c0] sm:$0xff]
    %v101 = vld [vmem:[#allocation6 + $0x1c8] sm:$0xff]
    %v102 = vld [vmem:[#allocation6 + $0x1d0] sm:$0xff]
    %v103 = vld [vmem:[#allocation6 + $0x1d8] sm:$0xff]
    %v104 = vld [vmem:[#allocation6 + $0x1e0] sm:$0xff]
    %v105 = vld [vmem:[#allocation6 + $0x1e8] sm:$0xff]
    %v106 = vld [vmem:[#allocation6 + $0x1f0] sm:$0xff]
    %v107 = vld [vmem:[#allocation6 + $0x1f8] sm:$0xff]
    %v108 = vld [vmem:[#allocation6 + $0x200] sm:$0xff]
    %v109 = vld [vmem:[#allocation6 + $0x208] sm:$0xff]
    %v110 = vld [vmem:[#allocation6 + $0x210] sm:$0xff]
    %v111 = vld [vmem:[#allocation6 + $0x218] sm:$0xff]
    %v112 = vld [vmem:[#allocation6 + $0x220] sm:$0xff]
    %v113 = vld [vmem:[#allocation6 + $0x228] sm:$0xff]
    %v114 = vld [vmem:[#allocation6 + $0x230] sm:$0xff]
    %v115 = vld [vmem:[#allocation6 + $0x238] sm:$0xff]
    %v116 = vld [vmem:[#allocation6 + $0x240] sm:$0xff]
    %v117 = vld [vmem:[#allocation6 + $0x248] sm:$0xff]
    %v118 = vld [vmem:[#allocation6 + $0x250] sm:$0xff]
    %v119 = vld [vmem:[#allocation6 + $0x258] sm:$0xff]
    %v120 = vld [vmem:[#allocation6 + $0x260] sm:$0xff]
    %v121 = vld [vmem:[#allocation6 + $0x268] sm:$0xff]
    %v122 = vld [vmem:[#allocation6 + $0x270] sm:$0xff]
    %v123 = vld [vmem:[#allocation6 + $0x278] sm:$0xff]
    %v124 = vld [vmem:[#allocation6 + $0x280] sm:$0xff]
    %v125 = vld [vmem:[#allocation6 + $0x288] sm:$0xff]
    %v126 = vld [vmem:[#allocation6 + $0x290] sm:$0xff]
    %v127 = vld [vmem:[#allocation6 + $0x298] sm:$0xff]
    %v128 = vld [vmem:[#allocation6 + $0x2a0] sm:$0xff]
    %v129 = vld [vmem:[#allocation6 + $0x2a8] sm:$0xff]
    %v130 = vld [vmem:[#allocation6 + $0x2b0] sm:$0xff]
    %v131 = vld [vmem:[#allocation6 + $0x2b8] sm:$0xff]
    %v132 = vld [vmem:[#allocation6 + $0x2c0] sm:$0xff]
    %v133 = vld [vmem:[#allocation6 + $0x2c8] sm:$0xff]
    %v134 = vld [vmem:[#allocation6 + $0x2d0] sm:$0xff]
    %v135 = vld [vmem:[#allocation6 + $0x2d8] sm:$0xff]
    %v136 = vld [vmem:[#allocation6 + $0x2e0] sm:$0xff]
    %v137 = vld [vmem:[#allocation6 + $0x2e8] sm:$0xff]
    %v138 = vld [vmem:[#allocation6 + $0x2f0] sm:$0xff]
    %v139 = vld [vmem:[#allocation6 + $0x2f8] sm:$0xff]
    %v140 = vld [vmem:[#allocation6 + $0x300] sm:$0xff]
    %v141 = vld [vmem:[#allocation6 + $0x308] sm:$0xff]
    %v142 = vld [vmem:[#allocation6 + $0x310] sm:$0xff]
    %v143 = vld [vmem:[#allocation6 + $0x318] sm:$0xff]
    %v144 = vld [vmem:[#allocation6 + $0x320] sm:$0xff]
    %v145 = vld [vmem:[#allocation6 + $0x328] sm:$0xff]
    %v146 = vld [vmem:[#allocation6 + $0x330] sm:$0xff]
    %v147 = vld [vmem:[#allocation6 + $0x338] sm:$0xff]
    %v148 = vld [vmem:[#allocation6 + $0x340] sm:$0xff]
    %v149 = vld [vmem:[#allocation6 + $0x348] sm:$0xff]
    %v150 = vld [vmem:[#allocation6 + $0x350] sm:$0xff]
    %v151 = vld [vmem:[#allocation6 + $0x358] sm:$0xff]
    %v152 = vld [vmem:[#allocation6 + $0x360] sm:$0xff]
    %v153 = vld [vmem:[#allocation6 + $0x368] sm:$0xff]
    %v154 = vld [vmem:[#allocation6 + $0x370] sm:$0xff]
    %v155 = vld [vmem:[#allocation6 + $0x378] sm:$0xff]
    %v156 = vld [vmem:[#allocation6 + $0x380] sm:$0xff]
    %v157 = vld [vmem:[#allocation6 + $0x388] sm:$0xff]
    %v158 = vld [vmem:[#allocation6 + $0x390] sm:$0xff]
    %v159 = vld [vmem:[#allocation6 + $0x398] sm:$0xff]
    %v160 = vld [vmem:[#allocation6 + $0x3a0] sm:$0xff]
    %v161 = vld [vmem:[#allocation6 + $0x3a8] sm:$0xff]
    %v162 = vld [vmem:[#allocation6 + $0x3b0] sm:$0xff]
    %v163 = vld [vmem:[#allocation6 + $0x3b8] sm:$0xff]
    %v164 = vld [vmem:[#allocation6 + $0x3c0] sm:$0xff]
    %v165 = vld [vmem:[#allocation6 + $0x3c8] sm:$0xff]
    %v166 = vld [vmem:[#allocation6 + $0x3d0] sm:$0xff]
    %v167 = vld [vmem:[#allocation6 + $0x3d8] sm:$0xff]
    %v168 = vld [vmem:[#allocation6 + $0x3e0] sm:$0xff]
    %v169 = vld [vmem:[#allocation6 + $0x3e8] sm:$0xff]
    %v170 = vld [vmem:[#allocation6 + $0x3f0] sm:$0xff]
    %v171 = vld [vmem:[#allocation6 + $0x3f8] sm:$0xff]
    %v172 = vld [vmem:[#allocation6 + $0x400] sm:$0xff]
    %v173 = vld [vmem:[#allocation6 + $0x408] sm:$0xff]
    %v174 = vld [vmem:[#allocation6 + $0x410] sm:$0xff]
    %v175 = vld [vmem:[#allocation6 + $0x418] sm:$0xff]
    %v176 = vld [vmem:[#allocation6 + $0x420] sm:$0xff]
    %v177 = vld [vmem:[#allocation6 + $0x428] sm:$0xff]
    %v178 = vld [vmem:[#allocation6 + $0x430] sm:$0xff]
    %v179 = vld [vmem:[#allocation6 + $0x438] sm:$0xff]
    %v180 = vld [vmem:[#allocation6 + $0x440] sm:$0xff]
    %v181 = vld [vmem:[#allocation6 + $0x448] sm:$0xff]
    %v182 = vld [vmem:[#allocation6 + $0x450] sm:$0xff]
    %v183 = vld [vmem:[#allocation6 + $0x458] sm:$0xff]
    %v184 = vld [vmem:[#allocation6 + $0x460] sm:$0xff]
    %v185 = vld [vmem:[#allocation6 + $0x468] sm:$0xff]
    %v186 = vld [vmem:[#allocation6 + $0x470] sm:$0xff]
    %v187 = vld [vmem:[#allocation6 + $0x478] sm:$0xff]
    %v188 = vld [vmem:[#allocation6 + $0x480] sm:$0xff]
    %v189 = vld [vmem:[#allocation6 + $0x488] sm:$0xff]
    %v190 = vld [vmem:[#allocation6 + $0x490] sm:$0xff]
    %v191 = vld [vmem:[#allocation6 + $0x498] sm:$0xff]
    %v192 = vld [vmem:[#allocation6 + $0x4a0] sm:$0xff]
    %v193 = vld [vmem:[#allocation6 + $0x4a8] sm:$0xff]
    %v194 = vld [vmem:[#allocation6 + $0x4b0] sm:$0xff]
    %v195 = vld [vmem:[#allocation6 + $0x4b8] sm:$0xff]
    %v196 = vld [vmem:[#allocation6 + $0x4c0] sm:$0xff]
    %v197 = vld [vmem:[#allocation6 + $0x4c8] sm:$0xff]
    %v198 = vld [vmem:[#allocation6 + $0x4d0] sm:$0xff]
    %v199 = vld [vmem:[#allocation6 + $0x4d8] sm:$0xff]
    %v200 = vld [vmem:[#allocation6 + $0x4e0] sm:$0xff]
    %v201 = vld [vmem:[#allocation6 + $0x4e8] sm:$0xff]
    %v202 = vld [vmem:[#allocation6 + $0x4f0] sm:$0xff]
    %v203 = vld [vmem:[#allocation6 + $0x4f8] sm:$0xff]
    %s204 = sld [smem:[#allocation2]]
    %v205 = vstv %s204
    %v208 = vlaneseq
    %v209 = vshrl.u32 %v208, 7
    %v210 = vsub.s32 0, %v209
    %v211 = vrot.slane %v42, %v210
    %v212 = vlaneseq
    %v213 = vshrl.u32 %v212, 7
    %v214 = vsub.s32 1, %v213
    %v215 = vrot.slane %v42, %v214
    %v216 = vlaneseq
    %v217 = vshrl.u32 %v216, 7
    %v218 = vsub.s32 2, %v217
    %v219 = vrot.slane %v42, %v218
    %v220 = vlaneseq
    %v221 = vshrl.u32 %v220, 7
    %v222 = vsub.s32 3, %v221
    %v223 = vrot.slane %v42, %v222
    %v224 = vlaneseq
    %v225 = vshrl.u32 %v224, 7
    %v226 = vsub.s32 4, %v225
    %v227 = vrot.slane %v42, %v226
    %v228 = vlaneseq
    %v229 = vshrl.u32 %v228, 7
    %v230 = vsub.s32 5, %v229
    %v231 = vrot.slane %v42, %v230
    %v232 = vlaneseq
    %v233 = vshrl.u32 %v232, 7
    %v234 = vsub.s32 6, %v233
    %v235 = vrot.slane %v42, %v234
    %v236 = vlaneseq
    %v237 = vshrl.u32 %v236, 7
    %v238 = vsub.s32 7, %v237
    %v239 = vrot.slane %v42, %v238
    %v240 = vlaneseq
    %v241 = vshrl.u32 %v240, 7
    %v242 = vsub.s32 0, %v241
    %v243 = vrot.slane %v43, %v242
    %v244 = vlaneseq
    %v245 = vshrl.u32 %v244, 7
    %v246 = vsub.s32 1, %v245
    %v247 = vrot.slane %v43, %v246
    %258 = vmatprep.subr.mxu0 0.0
    %259 = vmatpush1.msra.mxu0 %v44
    %260 = vmatprep.subr.mxu0 0.0
    %261 = vmatpush1.msra.mxu0 %v45
    %262 = vmatprep.subr.mxu0 0.0
    %263 = vmatpush1.msra.mxu0 %v46
    %264 = vmatprep.subr.mxu0 0.0
    %265 = vmatpush1.msra.mxu0 %v47
    %266 = vmatprep.subr.mxu0 0.0
    %267 = vmatpush1.msra.mxu0 %v48
    %268 = vmatprep.subr.mxu0 0.0
    %269 = vmatpush1.msra.mxu0 %v49
    %270 = vmatprep.subr.mxu0 0.0
    %271 = vmatpush1.msra.mxu0 %v50
    %272 = vmatprep.subr.mxu0 0.0
    %273 = vmatpush1.msra.mxu0 %v51
    %274 = vmatprep.subr.mxu0 0.0
    %275 = vmatpush1.msra.mxu0 %v52
    %276 = vmatprep.subr.mxu0 0.0
    %277 = vmatpush1.msra.mxu0 %v53
    %278 = vmatprep.subr.mxu0 0.0
    %279 = vmatpush1.msra.mxu0 %v54
    %280 = vmatprep.subr.mxu0 0.0
    %281 = vmatpush1.msra.mxu0 %v55
    %282 = vmatprep.subr.mxu0 0.0
    %283 = vmatpush1.msra.mxu0 %v56
    %284 = vmatprep.subr.mxu0 0.0
    %285 = vmatpush1.msra.mxu0 %v57
    %286 = vmatprep.subr.mxu0 0.0
    %287 = vmatpush1.msra.mxu0 %v58
    %288 = vmatprep.subr.mxu0 0.0
    %289 = vmatpush1.msra.mxu0 %v59
    %290 = vmatprep.subr.mxu0 0.0
    %291 = vmatpush1.msra.mxu0 %v60
    %292 = vmatprep.subr.mxu0 0.0
    %293 = vmatpush1.msra.mxu0 %v61
    %294 = vmatprep.subr.mxu0 0.0
    %295 = vmatpush1.msra.mxu0 %v62
    %296 = vmatprep.subr.mxu0 0.0
    %297 = vmatpush1.msra.mxu0 %v63
    %298 = vmatprep.subr.mxu0 0.0
    %299 = vmatpush1.msra.mxu0 %v64
    %300 = vmatprep.subr.mxu0 0.0
    %301 = vmatpush1.msra.mxu0 %v65
    %302 = vmatprep.subr.mxu0 0.0
    %303 = vmatpush1.msra.mxu0 %v66
    %304 = vmatprep.subr.mxu0 0.0
    %305 = vmatpush1.msra.mxu0 %v67
    %306 = vmatprep.subr.mxu0 0.0
    %307 = vmatpush1.msra.mxu0 %v68
    %308 = vmatprep.subr.mxu0 0.0
    %309 = vmatpush1.msra.mxu0 %v69
    %310 = vmatprep.subr.mxu0 0.0
    %311 = vmatpush1.msra.mxu0 %v70
    %312 = vmatprep.subr.mxu0 0.0
    %313 = vmatpush1.msra.mxu0 %v71
    %314 = vmatprep.subr.mxu0 0.0
    %315 = vmatpush1.msra.mxu0 %v72
    %316 = vmatprep.subr.mxu0 0.0
    %317 = vmatpush1.msra.mxu0 %v73
    %318 = vmatprep.subr.mxu0 0.0
    %319 = vmatpush1.msra.mxu0 %v74
    %320 = vmatprep.subr.mxu0 0.0
    %321 = vmatpush1.msra.mxu0 %v75
    %322 = vmatprep.mubr.f32.mxu0 %v215
    %323 = vmatmul.mubr.f32.gmra.mrb[0].mxu0 %v211
    %v324 = vpop.f32.mrb[0].mxu0
    %v325 = vadd.f32 %v205, %v324
    %v326 = vpop.f32.mrb[0].mxu0
    %327 = vdwg.mxu0
    %328 = vmatprep.subr.mxu0 0.0
    %329 = vmatpush1.msra.mxu0 %v76
    %330 = vmatprep.subr.mxu0 0.0
    %331 = vmatpush1.msra.mxu0 %v77
    %332 = vmatprep.subr.mxu0 0.0
    %333 = vmatpush1.msra.mxu0 %v78
    %334 = vmatprep.subr.mxu0 0.0
    %335 = vmatpush1.msra.mxu0 %v79
    %336 = vmatprep.subr.mxu0 0.0
    %337 = vmatpush1.msra.mxu0 %v80
    %338 = vmatprep.subr.mxu0 0.0
    %339 = vmatpush1.msra.mxu0 %v81
    %340 = vmatprep.subr.mxu0 0.0
    %341 = vmatpush1.msra.mxu0 %v82
    %342 = vmatprep.subr.mxu0 0.0
    %343 = vmatpush1.msra.mxu0 %v83
    %344 = vmatprep.subr.mxu0 0.0
    %345 = vmatpush1.msra.mxu0 %v84
    %346 = vmatprep.subr.mxu0 0.0
    %347 = vmatpush1.msra.mxu0 %v85
    %348 = vmatprep.subr.mxu0 0.0
    %349 = vmatpush1.msra.mxu0 %v86
    %350 = vmatprep.subr.mxu0 0.0
    %351 = vmatpush1.msra.mxu0 %v87
    %352 = vmatprep.subr.mxu0 0.0
    %353 = vmatpush1.msra.mxu0 %v88
    %354 = vmatprep.subr.mxu0 0.0
    %355 = vmatpush1.msra.mxu0 %v89
    %356 = vmatprep.subr.mxu0 0.0
    %357 = vmatpush1.msra.mxu0 %v90
    %358 = vmatprep.subr.mxu0 0.0
    %359 = vmatpush1.msra.mxu0 %v91
    %360 = vmatprep.subr.mxu0 0.0
    %361 = vmatpush1.msra.mxu0 %v92
    %362 = vmatprep.subr.mxu0 0.0
    %363 = vmatpush1.msra.mxu0 %v93
    %364 = vmatprep.subr.mxu0 0.0
    %365 = vmatpush1.msra.mxu0 %v94
    %366 = vmatprep.subr.mxu0 0.0
    %367 = vmatpush1.msra.mxu0 %v95
    %368 = vmatprep.subr.mxu0 0.0
    %369 = vmatpush1.msra.mxu0 %v96
    %370 = vmatprep.subr.mxu0 0.0
    %371 = vmatpush1.msra.mxu0 %v97
    %372 = vmatprep.subr.mxu0 0.0
    %373 = vmatpush1.msra.mxu0 %v98
    %374 = vmatprep.subr.mxu0 0.0
    %375 = vmatpush1.msra.mxu0 %v99
    %376 = vmatprep.subr.mxu0 0.0
    %377 = vmatpush1.msra.mxu0 %v100
    %378 = vmatprep.subr.mxu0 0.0
    %379 = vmatpush1.msra.mxu0 %v101
    %380 = vmatprep.subr.mxu0 0.0
    %381 = vmatpush1.msra.mxu0 %v102
    %382 = vmatprep.subr.mxu0 0.0
    %383 = vmatpush1.msra.mxu0 %v103
    %384 = vmatprep.subr.mxu0 0.0
    %385 = vmatpush1.msra.mxu0 %v104
    %386 = vmatprep.subr.mxu0 0.0
    %387 = vmatpush1.msra.mxu0 %v105
    %388 = vmatprep.subr.mxu0 0.0
    %389 = vmatpush1.msra.mxu0 %v106
    %390 = vmatprep.subr.mxu0 0.0
    %391 = vmatpush1.msra.mxu0 %v107
    %392 = vmatprep.mubr.f32.mxu0 %v223
    %393 = vmatmul.mubr.f32.gmra.mrb[0].mxu0 %v219
    %v394 = vpop.f32.mrb[0].mxu0
    %v395 = vadd.f32 %v325, %v394
    %v396 = vpop.f32.mrb[0].mxu0
    %397 = vdwg.mxu0
    %398 = vmatprep.subr.mxu0 0.0
    %399 = vmatpush1.msra.mxu0 %v108
    %400 = vmatprep.subr.mxu0 0.0
    %401 = vmatpush1.msra.mxu0 %v109
    %402 = vmatprep.subr.mxu0 0.0
    %403 = vmatpush1.msra.mxu0 %v110
    %404 = vmatprep.subr.mxu0 0.0
    %405 = vmatpush1.msra.mxu0 %v111
    %406 = vmatprep.subr.mxu0 0.0
    %407 = vmatpush1.msra.mxu0 %v112
    %408 = vmatprep.subr.mxu0 0.0
    %409 = vmatpush1.msra.mxu0 %v113
    %410 = vmatprep.subr.mxu0 0.0
    %411 = vmatpush1.msra.mxu0 %v114
    %412 = vmatprep.subr.mxu0 0.0
    %413 = vmatpush1.msra.mxu0 %v115
    %414 = vmatprep.subr.mxu0 0.0
    %415 = vmatpush1.msra.mxu0 %v116
    %416 = vmatprep.subr.mxu0 0.0
    %417 = vmatpush1.msra.mxu0 %v117
    %418 = vmatprep.subr.mxu0 0.0
    %419 = vmatpush1.msra.mxu0 %v118
    %420 = vmatprep.subr.mxu0 0.0
    %421 = vmatpush1.msra.mxu0 %v119
    %422 = vmatprep.subr.mxu0 0.0
    %423 = vmatpush1.msra.mxu0 %v120
    %424 = vmatprep.subr.mxu0 0.0
    %425 = vmatpush1.msra.mxu0 %v121
    %426 = vmatprep.subr.mxu0 0.0
    %427 = vmatpush1.msra.mxu0 %v122
    %428 = vmatprep.subr.mxu0 0.0
    %429 = vmatpush1.msra.mxu0 %v123
    %430 = vmatprep.subr.mxu0 0.0
    %431 = vmatpush1.msra.mxu0 %v124
    %432 = vmatprep.subr.mxu0 0.0
    %433 = vmatpush1.msra.mxu0 %v125
    %434 = vmatprep.subr.mxu0 0.0
    %435 = vmatpush1.msra.mxu0 %v126
    %436 = vmatprep.subr.mxu0 0.0
    %437 = vmatpush1.msra.mxu0 %v127
    %438 = vmatprep.subr.mxu0 0.0
    %439 = vmatpush1.msra.mxu0 %v128
    %440 = vmatprep.subr.mxu0 0.0
    %441 = vmatpush1.msra.mxu0 %v129
    %442 = vmatprep.subr.mxu0 0.0
    %443 = vmatpush1.msra.mxu0 %v130
    %444 = vmatprep.subr.mxu0 0.0
    %445 = vmatpush1.msra.mxu0 %v131
    %446 = vmatprep.subr.mxu0 0.0
    %447 = vmatpush1.msra.mxu0 %v132
    %448 = vmatprep.subr.mxu0 0.0
    %449 = vmatpush1.msra.mxu0 %v133
    %450 = vmatprep.subr.mxu0 0.0
    %451 = vmatpush1.msra.mxu0 %v134
    %452 = vmatprep.subr.mxu0 0.0
    %453 = vmatpush1.msra.mxu0 %v135
    %454 = vmatprep.subr.mxu0 0.0
    %455 = vmatpush1.msra.mxu0 %v136
    %456 = vmatprep.subr.mxu0 0.0
    %457 = vmatpush1.msra.mxu0 %v137
    %458 = vmatprep.subr.mxu0 0.0
    %459 = vmatpush1.msra.mxu0 %v138
    %460 = vmatprep.subr.mxu0 0.0
    %461 = vmatpush1.msra.mxu0 %v139
    %462 = vmatprep.mubr.f32.mxu0 %v231
    %463 = vmatmul.mubr.f32.gmra.mrb[0].mxu0 %v227
    %v464 = vpop.f32.mrb[0].mxu0
    %v465 = vadd.f32 %v395, %v464
    %v466 = vpop.f32.mrb[0].mxu0
    %467 = vdwg.mxu0
    %468 = vmatprep.subr.mxu0 0.0
    %469 = vmatpush1.msra.mxu0 %v140
    %470 = vmatprep.subr.mxu0 0.0
    %471 = vmatpush1.msra.mxu0 %v141
    %472 = vmatprep.subr.mxu0 0.0
    %473 = vmatpush1.msra.mxu0 %v142
    %474 = vmatprep.subr.mxu0 0.0
    %475 = vmatpush1.msra.mxu0 %v143
    %476 = vmatprep.subr.mxu0 0.0
    %477 = vmatpush1.msra.mxu0 %v144
    %478 = vmatprep.subr.mxu0 0.0
    %479 = vmatpush1.msra.mxu0 %v145
    %480 = vmatprep.subr.mxu0 0.0
    %481 = vmatpush1.msra.mxu0 %v146
    %482 = vmatprep.subr.mxu0 0.0
    %483 = vmatpush1.msra.mxu0 %v147
    %484 = vmatprep.subr.mxu0 0.0
    %485 = vmatpush1.msra.mxu0 %v148
    %486 = vmatprep.subr.mxu0 0.0
    %487 = vmatpush1.msra.mxu0 %v149
    %488 = vmatprep.subr.mxu0 0.0
    %489 = vmatpush1.msra.mxu0 %v150
    %490 = vmatprep.subr.mxu0 0.0
    %491 = vmatpush1.msra.mxu0 %v151
    %492 = vmatprep.subr.mxu0 0.0
    %493 = vmatpush1.msra.mxu0 %v152
    %494 = vmatprep.subr.mxu0 0.0
    %495 = vmatpush1.msra.mxu0 %v153
    %496 = vmatprep.subr.mxu0 0.0
    %497 = vmatpush1.msra.mxu0 %v154
    %498 = vmatprep.subr.mxu0 0.0
    %499 = vmatpush1.msra.mxu0 %v155
    %500 = vmatprep.subr.mxu0 0.0
    %501 = vmatpush1.msra.mxu0 %v156
    %502 = vmatprep.subr.mxu0 0.0
    %503 = vmatpush1.msra.mxu0 %v157
    %504 = vmatprep.subr.mxu0 0.0
    %505 = vmatpush1.msra.mxu0 %v158
    %506 = vmatprep.subr.mxu0 0.0
    %507 = vmatpush1.msra.mxu0 %v159
    %508 = vmatprep.subr.mxu0 0.0
    %509 = vmatpush1.msra.mxu0 %v160
    %510 = vmatprep.subr.mxu0 0.0
    %511 = vmatpush1.msra.mxu0 %v161
    %512 = vmatprep.subr.mxu0 0.0
    %513 = vmatpush1.msra.mxu0 %v162
    %514 = vmatprep.subr.mxu0 0.0
    %515 = vmatpush1.msra.mxu0 %v163
    %516 = vmatprep.subr.mxu0 0.0
    %517 = vmatpush1.msra.mxu0 %v164
    %518 = vmatprep.subr.mxu0 0.0
    %519 = vmatpush1.msra.mxu0 %v165
    %520 = vmatprep.subr.mxu0 0.0
    %521 = vmatpush1.msra.mxu0 %v166
    %522 = vmatprep.subr.mxu0 0.0
    %523 = vmatpush1.msra.mxu0 %v167
    %524 = vmatprep.subr.mxu0 0.0
    %525 = vmatpush1.msra.mxu0 %v168
    %526 = vmatprep.subr.mxu0 0.0
    %527 = vmatpush1.msra.mxu0 %v169
    %528 = vmatprep.subr.mxu0 0.0
    %529 = vmatpush1.msra.mxu0 %v170
    %530 = vmatprep.subr.mxu0 0.0
    %531 = vmatpush1.msra.mxu0 %v171
    %532 = vmatprep.mubr.f32.mxu0 %v239
    %533 = vmatmul.mubr.f32.gmra.mrb[0].mxu0 %v235
    %v534 = vpop.f32.mrb[0].mxu0
    %v535 = vadd.f32 %v465, %v534
    %v536 = vpop.f32.mrb[0].mxu0
    %537 = vdwg.mxu0
    %538 = vmatprep.subr.mxu0 0.0
    %539 = vmatpush1.msra.mxu0 %v172
    %540 = vmatprep.subr.mxu0 0.0
    %541 = vmatpush1.msra.mxu0 %v173
    %542 = vmatprep.subr.mxu0 0.0
    %543 = vmatpush1.msra.mxu0 %v174
    %544 = vmatprep.subr.mxu0 0.0
    %545 = vmatpush1.msra.mxu0 %v175
    %546 = vmatprep.subr.mxu0 0.0
    %547 = vmatpush1.msra.mxu0 %v176
    %548 = vmatprep.subr.mxu0 0.0
    %549 = vmatpush1.msra.mxu0 %v177
    %550 = vmatprep.subr.mxu0 0.0
    %551 = vmatpush1.msra.mxu0 %v178
    %552 = vmatprep.subr.mxu0 0.0
    %553 = vmatpush1.msra.mxu0 %v179
    %554 = vmatprep.subr.mxu0 0.0
    %555 = vmatpush1.msra.mxu0 %v180
    %556 = vmatprep.subr.mxu0 0.0
    %557 = vmatpush1.msra.mxu0 %v181
    %558 = vmatprep.subr.mxu0 0.0
    %559 = vmatpush1.msra.mxu0 %v182
    %560 = vmatprep.subr.mxu0 0.0
    %561 = vmatpush1.msra.mxu0 %v183
    %562 = vmatprep.subr.mxu0 0.0
    %563 = vmatpush1.msra.mxu0 %v184
    %564 = vmatprep.subr.mxu0 0.0
    %565 = vmatpush1.msra.mxu0 %v185
    %566 = vmatprep.subr.mxu0 0.0
    %567 = vmatpush1.msra.mxu0 %v186
    %568 = vmatprep.subr.mxu0 0.0
    %569 = vmatpush1.msra.mxu0 %v187
    %570 = vmatprep.subr.mxu0 0.0
    %571 = vmatpush1.msra.mxu0 %v188
    %572 = vmatprep.subr.mxu0 0.0
    %573 = vmatpush1.msra.mxu0 %v189
    %574 = vmatprep.subr.mxu0 0.0
    %575 = vmatpush1.msra.mxu0 %v190
    %576 = vmatprep.subr.mxu0 0.0
    %577 = vmatpush1.msra.mxu0 %v191
    %578 = vmatprep.subr.mxu0 0.0
    %579 = vmatpush1.msra.mxu0 %v192
    %580 = vmatprep.subr.mxu0 0.0
    %581 = vmatpush1.msra.mxu0 %v193
    %582 = vmatprep.subr.mxu0 0.0
    %583 = vmatpush1.msra.mxu0 %v194
    %584 = vmatprep.subr.mxu0 0.0
    %585 = vmatpush1.msra.mxu0 %v195
    %586 = vmatprep.subr.mxu0 0.0
    %587 = vmatpush1.msra.mxu0 %v196
    %588 = vmatprep.subr.mxu0 0.0
    %589 = vmatpush1.msra.mxu0 %v197
    %590 = vmatprep.subr.mxu0 0.0
    %591 = vmatpush1.msra.mxu0 %v198
    %592 = vmatprep.subr.mxu0 0.0
    %593 = vmatpush1.msra.mxu0 %v199
    %594 = vmatprep.subr.mxu0 0.0
    %595 = vmatpush1.msra.mxu0 %v200
    %596 = vmatprep.subr.mxu0 0.0
    %597 = vmatpush1.msra.mxu0 %v201
    %598 = vmatprep.subr.mxu0 0.0
    %599 = vmatpush1.msra.mxu0 %v202
    %600 = vmatprep.subr.mxu0 0.0
    %601 = vmatpush1.msra.mxu0 %v203
    %602 = vmatprep.mubr.f32.mxu0 %v247
    %603 = vmatmul.mubr.f32.gmra.mrb[0].mxu0 %v243
    %v604 = vpop.f32.mrb[0].mxu0
    %v605 = vadd.f32 %v535, %v604
    %v606 = vpop.f32.mrb[0].mxu0
    %607 = vdwg.mxu0
    %608 = vst [vmem:[#allocation8] sm:$0x1] %v605
    // Predicated region
    $region22: #{tpu_custom_call.1} parent=1 // pred_check
      _
    $region23: #{tpu_custom_call.1} parent=1 // pred_check_branch
      %610 = sbr.rel (0) target = $region25
    $region24: #{tpu_custom_call.1} parent=1 // pred_region
      %s612 = ssub.s32 16, 16
      %613 = vsyncadd [#allocation5], %s612
      %s615 = sshll.u32 [#allocation8], 4
      %s616 = int_to_ptr.vmem [resolvable:$true] %s615
      %618 = dma.vmem_to_hbm [thread:$0]  %s616, 16, %s3, [#allocation5]
    $region25: #{tpu_custom_call.1} parent=1 // pred_fallthru
      _
    // Predicated region
    $region26: #{tpu_custom_call.1} parent=1 // pred_check
      _
    $region27: #{tpu_custom_call.1} parent=1 // pred_check_branch
      %620 = sbr.rel (0) target = $region29
    $region28: #{tpu_custom_call.1} parent=1 // pred_region
      %621 = dma.done [#allocation5], 16
    $region29: #{tpu_custom_call.1} parent=1 // pred_fallthru
      _
    %622 = vsyncpa [#allocation4], 1
    %623 = vsyncpa [#allocation7], 1
    %624 = vsyncpa [#allocation5], 1

</llo_original>
